<compile_context>
chip_gen: v6e
topology: v6e:2x2x1
jax: 0.10.0
libtpu: 0.0.40
codegen_flags: <defaults>
</compile_context>

<pallas_src>
import functools

import jax
import jax.numpy as jnp
from jax import lax
from jax.experimental import pallas as pl
from jax.experimental.pallas import tpu as pltpu


def _l2_loss_kernel(pred_ref, lab_ref, loss_ref, acc_ref, *,
                    inv_b, tb, b, mask_rows):
    i = pl.program_id(0)

    @pl.when(i == 0)
    def _init():
        acc_ref[0] = jnp.float32(0.0)

    diff = lab_ref[...] - pred_ref[...]
    sq = diff * diff
    if mask_rows:
        # Last block may extend past the true batch; zero out garbage rows.
        rows = i * tb + lax.broadcasted_iota(jnp.int32, sq.shape, 0)
        sq = jnp.where(rows < b, sq, 0.0)

    # One reduce per tile, accumulated into a scalar SMEM scratch.
    acc_ref[0] += jnp.sum(sq)

    @pl.when(i == pl.num_programs(0) - 1)
    def _finalize():
        # mean over batch == (global sum of squared diffs) / B
        loss_ref[0, 0] = acc_ref[0] * inv_b


def _choose_block_rows(b, d):
    # Aim for ~1 MiB (2^18 f32 elems) per input block; cap rows; multiple of 8.
    tb = min((1 << 18) // max(d, 1), 4096, b)
    tb = max(8, (tb // 8) * 8)
    return tb


def l2_loss(output, labels, *, block_rows=None):
    assert output.shape == labels.shape
    assert output.ndim == 2
    b, d = output.shape
    output = output.astype(jnp.float32)
    labels = labels.astype(jnp.float32)

    tb = _choose_block_rows(b, d) if block_rows is None else block_rows
    grid = (pl.cdiv(b, tb),)
    mask_rows = (b % tb) != 0

    kernel = functools.partial(
        _l2_loss_kernel, inv_b=1.0 / b, tb=tb, b=b, mask_rows=mask_rows)

    out = pl.pallas_call(
        kernel,
        out_shape=jax.ShapeDtypeStruct((1, 1), jnp.float32),
        grid_spec=pltpu.PrefetchScalarGridSpec(
            num_scalar_prefetch=0,
            grid=grid,
            in_specs=[
                pl.BlockSpec((tb, d), lambda i: (i, 0)),
                pl.BlockSpec((tb, d), lambda i: (i, 0)),
            ],
            out_specs=pl.BlockSpec(memory_space=pltpu.SMEM),
            scratch_shapes=[pltpu.SMEM((1,), jnp.float32)],
        ),
        compiler_params=pltpu.CompilerParams(
            # Single grid axis carries the accumulator -> reduction axis.
            dimension_semantics=("arbitrary",),
            # Explicit budget: safe on v5e/v6e (128 MiB) and v7x (64 MiB).
            vmem_limit_bytes=32 * 1024 * 1024,
        ),
        cost_estimate=pl.CostEstimate(
            flops=3 * b * d,
            transcendentals=0,
            bytes_accessed=2 * b * d * 4 + 4,
        ),
    )(output, labels)
    return out[0, 0]


def _reference(output, labels):
    return jnp.mean(jnp.sum((labels - output) ** 2, axis=1))


if __name__ == "__main__":
    key = jax.random.PRNGKey(0)

    # Main check: exercises init / accumulate / finalize across 4 grid steps.
    B, D = 64, 32
    k1, k2, k3, k4 = jax.random.split(key, 4)
    output = jax.random.normal(k1, (B, D), dtype=jnp.float32)
    labels = jax.random.normal(k2, (B, D), dtype=jnp.float32)

    loss = l2_loss(output, labels, block_rows=16)
    jax.block_until_ready(loss)
    ref = _reference(output, labels)
    assert jnp.allclose(loss, ref, rtol=1e-5, atol=1e-5), (loss, ref)

    # Second check: batch not divisible by the block -> masked remainder path.
    B2 = 50
    output2 = jax.random.normal(k3, (B2, D), dtype=jnp.float32)
    labels2 = jax.random.normal(k4, (B2, D), dtype=jnp.float32)

    loss2 = l2_loss(output2, labels2, block_rows=16)
    jax.block_until_ready(loss2)
    ref2 = _reference(output2, labels2)
    assert jnp.allclose(loss2, ref2, rtol=1e-5, atol=1e-5), (loss2, ref2)

    print("KERNEL_OK")
</pallas_src>

<mosaic_0001>
module attributes {stable_mosaic.version = 11 : i64} {
  func.func @_l2_loss_kernel(%arg0: i32, %arg1: memref<16x32xf32, #tpu.memory_space<vmem>>, %arg2: memref<16x32xf32, #tpu.memory_space<vmem>>, %arg3: memref<1x1xf32, #tpu.memory_space<smem>>, %arg4: memref<1xf32, #tpu.memory_space<smem>>) attributes {dimension_semantics = [#tpu.dimension_semantics<arbitrary>], iteration_bounds = array<i64: 4>, scalar_prefetch = 0 : i64, scratch_operands = 1 : i64, tpu.core_type = #tpu.core_type<tc>, window_params = [{transform_indices = @transform_0, window_bounds = array<i64: 16, 32>}, {transform_indices = @transform_1, window_bounds = array<i64: 16, 32>}, {transform_indices = @transform_2, window_bounds = array<i64: 1, 1>}]} {
    %c0_i32 = arith.constant 0 : i32
    %0 = arith.cmpi eq, %arg0, %c0_i32 : i32
    %1 = arith.extui %0 : i1 to i32
    %c0_i32_0 = arith.constant 0 : i32
    %2 = arith.cmpi ne, %1, %c0_i32_0 : i32
    scf.if %2 {
      %cst_7 = arith.constant 0.000000e+00 : f32
      %c0_8 = arith.constant 0 : index
      %17 = memref.load %arg4[%c0_8] : memref<1xf32, #tpu.memory_space<smem>>
      memref.store %cst_7, %arg4[%c0_8] : memref<1xf32, #tpu.memory_space<smem>>
    } else {
    }
    %c0 = arith.constant 0 : index
    %c0_1 = arith.constant 0 : index
    %3 = vector.load %arg2[%c0, %c0_1] : memref<16x32xf32, #tpu.memory_space<vmem>>, vector<16x32xf32>
    %c0_2 = arith.constant 0 : index
    %c0_3 = arith.constant 0 : index
    %4 = vector.load %arg1[%c0_2, %c0_3] : memref<16x32xf32, #tpu.memory_space<vmem>>, vector<16x32xf32>
    %5 = arith.subf %3, %4 : vector<16x32xf32>
    %6 = arith.mulf %5, %5 : vector<16x32xf32>
    %c0_4 = arith.constant 0 : index
    %7 = memref.load %arg4[%c0_4] : memref<1xf32, #tpu.memory_space<smem>>
    %8 = vector.shape_cast %6 : vector<16x32xf32> to vector<1x16x32xf32>
    %cst = arith.constant dense<0.000000e+00> : vector<1xf32>
    %9 = vector.multi_reduction <add>, %8, %cst [1, 2] : vector<1x16x32xf32> to vector<1xf32>
    %10 = vector.shape_cast %9 : vector<1xf32> to vector<1x1x1xf32>
    %11 = vector.extract %10[0, 0, 0] : f32 from vector<1x1x1xf32>
    %12 = arith.addf %7, %11 : f32
    %c0_5 = arith.constant 0 : index
    %13 = memref.load %arg4[%c0_5] : memref<1xf32, #tpu.memory_space<smem>>
    memref.store %12, %arg4[%c0_5] : memref<1xf32, #tpu.memory_space<smem>>
    %c3_i32 = arith.constant 3 : i32
    %14 = arith.cmpi eq, %arg0, %c3_i32 : i32
    %15 = arith.extui %14 : i1 to i32
    %c0_i32_6 = arith.constant 0 : i32
    %16 = arith.cmpi ne, %15, %c0_i32_6 : i32
    scf.if %16 {
      %c0_7 = arith.constant 0 : index
      %17 = memref.load %arg4[%c0_7] : memref<1xf32, #tpu.memory_space<smem>>
      %cst_8 = arith.constant 1.562500e-02 : f32
      %18 = arith.mulf %17, %cst_8 : f32
      %c0_9 = arith.constant 0 : index
      %c0_10 = arith.constant 0 : index
      %19 = memref.load %arg3[%c0_9, %c0_10] : memref<1x1xf32, #tpu.memory_space<smem>>
      memref.store %18, %arg3[%c0_9, %c0_10] : memref<1x1xf32, #tpu.memory_space<smem>>
    } else {
    }
    return
  }
  func.func @transform_0(%arg0: i32) -> (i32, i32) {
    %c0_i32 = arith.constant 0 : i32
    %c0_i32_0 = arith.constant 0 : i32
    return %arg0, %c0_i32 : i32, i32
  }
  func.func @transform_1(%arg0: i32) -> (i32, i32) {
    %c0_i32 = arith.constant 0 : i32
    %c0_i32_0 = arith.constant 0 : i32
    return %arg0, %c0_i32 : i32, i32
  }
  func.func @transform_2(%arg0: i32) -> (i32, i32) {
    %c0_i32 = arith.constant 0 : i32
    %c0_i32_0 = arith.constant 0 : i32
    %c0_i32_1 = arith.constant 0 : i32
    return %c0_i32, %c0_i32_0 : i32, i32
  }
}

</mosaic_0001>

<llo_original>
// kernel: tpu_custom_call.1
$region0: #{tpu_custom_call.1}
  #allocation0 [shape = 'u32[]', space=smem, size = 0x4, offset = 0x4, fixed_abs, tag = 'smem constant byte address 0x4 - core index']
  #allocation1 [shape = 'u32[144,128]{1,0:T(1,128)}', space=vmem, size = 0x12000, scoped, tag = 'internal scratch']
  #allocation2 [shape = 'f32[1]{0:T(128)}', space=smem, size = 0x200, scoped, tag = 'scratch operand']
  %s0 = inlined_call_operand.vmem [shape: f32[64,32], index: 0, kind: input, shape index: {}]
  %s1 = inlined_call_operand.vmem [shape: f32[64,32], index: 1, kind: input, shape index: {}]
  %s2 = inlined_call_operand.hbm [shape: f32[1,1], index: 2, kind: output, shape index: {}]
  %s3 = sld [smem:[#allocation0]]
  $region49: #{tpu_custom_call.1} parent=0
    _
  %s5 = ssub.s32 1, %s3
  %s6 = scalar_select 0, %s5, %s3
  $region1: #{tpu_custom_call.1} parent=0
    #allocation3 [shape = 'u8[512]{0}', space=smem, size = 0x200, scoped, tag = 'output window, operand 0, single buffered']
    #allocation4 [shape = 's32[2]{0}', space=sflag, size = 0x8, scoped, tag = 'scoped memory for tpu_custom_call.1']
    %7 = vsyncpa [#allocation4], 0
    loop: start=0, step=1, limit=6
    $region2: #{tpu_custom_call.1} parent=1 // loop_pre_header
      _
    $region3: #{tpu_custom_call.1} parent=1 // loop_header
      %s9 = sphi 0, %s13
      %p10 = scmp.ge.s32.totalorder %s9, 6
      %s19 = sphi 0, %s21
      %s22 = sphi 0, %s19
      %s23 = sphi 0, %s22
      %s39 = sphi 0, %s23
      %s45 = sphi 0, %s47
      %s48 = sphi 0, %s45
      %s49 = sphi 0, %s48
      %s65 = sphi 0, %s49
      %s69 = sphi 0, %s69
      %s71 = sphi 0, %s69
      %s72 = sphi 0, %s71
      %s86 = sphi 0, %s72
    $region4: #{tpu_custom_call.1} parent=1 // loop_header_branch
      %12 = sbr.rel (%p10) target = $region8
    $region5: #{tpu_custom_call.1} parent=1 // loop_body
      %s14 = ssub.s32 %s9, 1
      %s15 = ssub.s32 %s9, 2
      %s16 = sadd.s32 %s9, 1
      %s17 = ssub.s32 %s9, %s16
      %p18 = scmp.eq.s32.totalorder %s17, 0
      %s20 = sadd.s32 %s19, 1
      %s21 = scalar_select %p18, %s19, %s20
      %p24 = pneg %p18
      %p25 = scmp.eq.s32.totalorder %s9, 3
      %p26 = por %p24, %p25
      %p27 = scmp.ne.s32.totalorder %s19, %s22
      %p28 = scmp.eq.s32.totalorder %s9, 0
      %p29 = por %p27, %p28
      %p30 = scmp.ne.s32.totalorder %s19, %s22
      %p31 = scmp.eq.s32.totalorder %s14, 3
      %p32 = por %p30, %p31
      %p33 = scmp.ne.s32.totalorder %s22, %s23
      %p34 = scmp.eq.s32.totalorder %s14, 0
      %p35 = por %p33, %p34
      %p36 = scmp.ne.s32.totalorder %s22, %s23
      %p37 = scmp.eq.s32.totalorder %s15, 3
      %p38 = por %p36, %p37
      %p40 = scmp.ne.s32.totalorder %s23, %s39
      %p41 = scmp.eq.s32.totalorder %s15, 0
      %p42 = por %p40, %p41
      %s43 = ssub.s32 %s9, %s16
      %p44 = scmp.eq.s32.totalorder %s43, 0
      %s46 = sadd.s32 %s45, 1
      %s47 = scalar_select %p44, %s45, %s46
      %p50 = pneg %p44
      %p51 = scmp.eq.s32.totalorder %s9, 3
      %p52 = por %p50, %p51
      %p53 = scmp.ne.s32.totalorder %s45, %s48
      %p54 = scmp.eq.s32.totalorder %s9, 0
      %p55 = por %p53, %p54
      %p56 = scmp.ne.s32.totalorder %s45, %s48
      %p57 = scmp.eq.s32.totalorder %s14, 3
      %p58 = por %p56, %p57
      %p59 = scmp.ne.s32.totalorder %s48, %s49
      %p60 = scmp.eq.s32.totalorder %s14, 0
      %p61 = por %p59, %p60
      %p62 = scmp.ne.s32.totalorder %s48, %s49
      %p63 = scmp.eq.s32.totalorder %s15, 3
      %p64 = por %p62, %p63
      %p66 = scmp.ne.s32.totalorder %s49, %s65
      %p67 = scmp.eq.s32.totalorder %s15, 0
      %p68 = por %p66, %p67
      %s70 = sadd.s32 %s69, 1
      %p73 = scmp.eq.s32.totalorder %s9, 3
      %p74 = scmp.ne.s32.totalorder %s69, %s71
      %p75 = scmp.eq.s32.totalorder %s9, 0
      %p76 = por %p74, %p75
      %p77 = scmp.ne.s32.totalorder %s69, %s71
      %p78 = scmp.eq.s32.totalorder %s14, 3
      %p79 = por %p77, %p78
      %p80 = scmp.ne.s32.totalorder %s71, %s72
      %p81 = scmp.eq.s32.totalorder %s14, 0
      %p82 = por %p80, %p81
      %p83 = scmp.ne.s32.totalorder %s71, %s72
      %p84 = scmp.eq.s32.totalorder %s15, 3
      %p85 = por %p83, %p84
      %p87 = scmp.ne.s32.totalorder %s72, %s86
      %p88 = scmp.eq.s32.totalorder %s15, 0
      %p89 = por %p87, %p88
      %p90 = scmp.le.s32.totalorder 1, %s9
      %p91 = scmp.lt.s32.totalorder %s9, 5
      %p92 = pnand %p90, %p91
      %p93 = pneg %p92
      // Predicated region
      $region9: #{tpu_custom_call.1} parent=5 // pred_check
        _
      $region10: #{tpu_custom_call.1} parent=5 // pred_check_branch
        %95 = sbr.rel (%p92) target = $region12
      $region11: #{tpu_custom_call.1} parent=5 // pred_region
        %s96 = ssub.s32 %s9, 1
      $region12: #{tpu_custom_call.1} parent=5 // pred_fallthru
        _
      %p97 = scmp.lt.s32.totalorder %s9, 4
      // Predicated region
      $region13: #{tpu_custom_call.1} parent=5 // pred_check
        %p98 = pneg %p97
      $region14: #{tpu_custom_call.1} parent=5 // pred_check_branch
        %100 = sbr.rel (%p98) target = $region16
      $region15: #{tpu_custom_call.1} parent=5 // pred_region
        // Predicated region
        $region17: #{tpu_custom_call.1} parent=15 // pred_check
          %p101 = pneg %p29
        $region18: #{tpu_custom_call.1} parent=15 // pred_check_branch
          %103 = sbr.rel (%p101) target = $region20
        $region19: #{tpu_custom_call.1} parent=15 // pred_region
          %s104 = smul.u32 2, %s9
          %p105 = scmp.lt.s32.totalorder %s104, 7
          %s106 = scalar_select %p105, %s104, 7
          %s107 = smul.addr %s106, 8
          %s108 = scalar_lea.vmem %s0, %s107
          %s109 = smul.u32 2, %s9
        $region20: #{tpu_custom_call.1} parent=15 // pred_fallthru
          _
        // Predicated region
        $region21: #{tpu_custom_call.1} parent=15 // pred_check
          %p110 = pneg %p55
        $region22: #{tpu_custom_call.1} parent=15 // pred_check_branch
          %112 = sbr.rel (%p110) target = $region24
        $region23: #{tpu_custom_call.1} parent=15 // pred_region
          %s113 = smul.u32 2, %s9
          %p114 = scmp.lt.s32.totalorder %s113, 7
          %s115 = scalar_select %p114, %s113, 7
          %s116 = smul.addr %s115, 8
          %s117 = scalar_lea.vmem %s1, %s116
          %s118 = smul.u32 2, %s9
        $region24: #{tpu_custom_call.1} parent=15 // pred_fallthru
          _
      $region16: #{tpu_custom_call.1} parent=5 // pred_fallthru
        _
      %p119 = scmp.le.s32.totalorder 1, %s9
      %p120 = scmp.lt.s32.totalorder %s9, 5
      %p121 = pnand %p119, %p120
      %p122 = pneg %p121
      // Predicated region
      $region25: #{tpu_custom_call.1} parent=5 // pred_check
        _
      $region26: #{tpu_custom_call.1} parent=5 // pred_check_branch
        %124 = sbr.rel (%p121) target = $region28
      $region27: #{tpu_custom_call.1} parent=5 // pred_region
        %s125 = ssub.s32 %s9, 1
        %s126 = smul.u32 2, %s14
        %p127 = scmp.lt.s32.totalorder %s126, 7
        %s128 = scalar_select %p127, %s126, 7
        %s129 = smul.addr %s128, 8
        %s130 = scalar_lea.vmem %s0, %s129
        %p131 = pneg %p35
        %p132 = pneg %p32
        %s133 = smul.u32 2, %s14
        %p134 = scmp.lt.s32.totalorder %s133, 7
        %s135 = scalar_select %p134, %s133, 7
        %s136 = smul.addr %s135, 8
        %s137 = scalar_lea.vmem %s1, %s136
        %p138 = pneg %p61
        %p139 = pneg %p58
        %p140 = pneg %p82
        %p141 = pneg %p79
        %s142 = smul.u32 2, %s14
        %p143 = scmp.lt.s32.totalorder %s142, 7
        %s144 = scalar_select %p143, %s142, 7
        %s145 = smul.addr %s144, 8
        %s146 = scalar_lea.vmem %s0, %s145
        %s147 = smul.u32 2, %s14
        %s148 = smul.u32 2, %s14
        %p149 = scmp.lt.s32.totalorder %s148, 7
        %s150 = scalar_select %p149, %s148, 7
        %s151 = smul.addr %s150, 8
        %s152 = scalar_lea.vmem %s1, %s151
        %s153 = smul.u32 2, %s14
        %p154 = scmp.eq.s32.totalorder %s14, 0
        // Predicated region
        $region29: #{tpu_custom_call.1} parent=27 // pred_check
          %p155 = pneg %p154
        $region30: #{tpu_custom_call.1} parent=27 // pred_check_branch
          %157 = sbr.rel (%p155) target = $region32
        $region31: #{tpu_custom_call.1} parent=27 // pred_region
          %s158 = scalar_lea.smem [#allocation2], 0
          %159 = sst [smem:[%s158]] 0.0
        $region32: #{tpu_custom_call.1} parent=27 // pred_fallthru
          _
        %v160 = vld [vmem:[%s152] sm:$0xff]
        %v161 = vld [vmem:[%s152 + $0x8] sm:$0xff]
        %v162 = vld [vmem:[%s146] sm:$0xff]
        %v163 = vld [vmem:[%s146 + $0x8] sm:$0xff]
        %v164 = vsub.f32 %v160, %v162
        %v165 = vsub.f32 %v161, %v163
        %v166 = vmul.f32 %v164, %v164
        %v167 = vmul.f32 %v165, %v165
        %s168 = sld [smem:[#allocation2]]
        %vm169 = vcmask 261120
        %v170 = vsel %vm169, %v166, 0.0
        %v171 = vsel %vm169, %v167, 0.0
        %v172 = vadd.f32 %v170, %v171
        %173 = vadd.xlane.f32.xlu0 %v172
        %v174 = vpop.xlane.xlu0 %173
        %v175 = vrot.slane %v174, 4
        %v176 = vadd.f32 %v174, %v175
        %v177 = vrot.slane %v176, 2
        %v178 = vadd.f32 %v176, %v177
        %v179 = vrot.slane %v178, 1
        %v180 = vadd.f32 %v178, %v179
        %s181 = vtos %v180
        %s182 = sadd.f32 %s168, %s181
        %s183 = scalar_lea.smem [#allocation2], 0
        %184 = sst [smem:[%s183]] %s182
        %p185 = scmp.eq.s32.totalorder %s14, 3
        // Predicated region
        $region33: #{tpu_custom_call.1} parent=27 // pred_check
          %p186 = pneg %p185
        $region34: #{tpu_custom_call.1} parent=27 // pred_check_branch
          %188 = sbr.rel (%p186) target = $region36
        $region35: #{tpu_custom_call.1} parent=27 // pred_region
          %s189 = sld [smem:[#allocation2]]
          %s190 = smul.f32 %s189, 0.015625
          %s191 = scalar_lea.smem [#allocation3], 0
          %192 = sst [smem:[%s191]] %s190
        $region36: #{tpu_custom_call.1} parent=27 // pred_fallthru
          _
        // Predicated region
        $region37: #{tpu_custom_call.1} parent=27 // pred_check
          %p193 = pneg %p79
        $region38: #{tpu_custom_call.1} parent=27 // pred_check_branch
          %195 = sbr.rel (%p193) target = $region40
        $region39: #{tpu_custom_call.1} parent=27 // pred_region
          %s197 = ssub.s32 16, 16
          %198 = vsyncadd [#allocation4], %s197
          %201 = dma.smem_to_hbm [#allocation3], 16, %s2, [#allocation4]
        $region40: #{tpu_custom_call.1} parent=27 // pred_fallthru
          _
        // Predicated region
        $region41: #{tpu_custom_call.1} parent=27 // pred_check
          %p202 = pneg %p79
        $region42: #{tpu_custom_call.1} parent=27 // pred_check_branch
          %204 = sbr.rel (%p202) target = $region44
        $region43: #{tpu_custom_call.1} parent=27 // pred_region
          %205 = dma.done [#allocation4], 16
        $region44: #{tpu_custom_call.1} parent=27 // pred_fallthru
          _
        %206 = sfence
      $region28: #{tpu_custom_call.1} parent=5 // pred_fallthru
        _
      %p207 = scmp.le.s32.totalorder 2, %s9
      // Predicated region
      $region45: #{tpu_custom_call.1} parent=5 // pred_check
        %p208 = pneg %p207
      $region46: #{tpu_custom_call.1} parent=5 // pred_check_branch
        %210 = sbr.rel (%p208) target = $region48
      $region47: #{tpu_custom_call.1} parent=5 // pred_region
        %s211 = ssub.s32 %s9, 2
      $region48: #{tpu_custom_call.1} parent=5 // pred_fallthru
        _
    $region6: #{tpu_custom_call.1} parent=1 // loop_footer
      %s13 = sadd.s32 1, %s9
    $region7: #{tpu_custom_call.1} parent=1 // loop_footer_branch
      %8 = sbr.rel target = $region3
    $region8: #{tpu_custom_call.1} parent=1 // loop_exit
      _
    %212 = vsyncpa [#allocation4], 1
    %s213 = scalar_lea.sflag [#allocation4], 1
    %214 = vsyncpa %s213, 1

</llo_original>
